<compile_context>
chip_gen: v7x
topology: tpu7x:2x2x1
jax: 0.10.0
libtpu: 0.0.40
codegen_flags: <defaults>
</compile_context>

<pallas_src>
import math
import functools

import jax
import jax.numpy as jnp
from jax.experimental import pallas as pl
from jax.experimental.pallas import tpu as pltpu


# ----------------------------------------------------------------------------
# Kernels (purely elementwise; the op is HBM-bandwidth bound)
# ----------------------------------------------------------------------------
def _pe_add_kernel(x_ref, pe_ref, o_ref):
    # x_ref/o_ref: (TB, TC) tile of the flattened (B, S*D) activations.
    # pe_ref:      (1, TC) tile of the flattened positional encoding (broadcast over rows).
    o_ref[...] = x_ref[...] + pe_ref[...]


def _pe_add_dropout_kernel(x_ref, pe_ref, u_ref, o_ref, *, p, scale):
    # Training-mode dropout: keep with prob (1-p), scale kept values by 1/(1-p).
    # u_ref holds uniform [0, 1) randoms generated in the wrapper.
    y = x_ref[...] + pe_ref[...]
    keep = (u_ref[...] >= jnp.float32(p)).astype(y.dtype)
    o_ref[...] = y * (keep * jnp.asarray(scale, dtype=y.dtype))


# ----------------------------------------------------------------------------
# Parameter setup (same formula as the PyTorch __init__)
# ----------------------------------------------------------------------------
def make_positional_encoding(d_model, max_len=512, dtype=jnp.float32):
    position = jnp.arange(max_len, dtype=jnp.float32)[:, None]                    # (max_len, 1)
    div_term = jnp.exp(jnp.arange(0, d_model, 2, dtype=jnp.float32)
                       * -(math.log(10000.0) / d_model))                          # (d_model//2,)
    angles = position * div_term                                                  # (max_len, d_model//2)
    pe = jnp.zeros((max_len, d_model), dtype=jnp.float32)
    pe = pe.at[:, 0::2].set(jnp.sin(angles))
    pe = pe.at[:, 1::2].set(jnp.cos(angles))
    return pe.astype(dtype)                                                       # (max_len, d_model)


# ----------------------------------------------------------------------------
# Tiling helper
# ----------------------------------------------------------------------------
def _pick_tile(n, unit, max_tile):
    """Largest multiple of `unit` that divides n and is <= max_tile; else n (full dim)."""
    best = None
    limit = min(n, max_tile)
    for cand in range(unit, limit + 1, unit):
        if n % cand == 0:
            best = cand
    return best if best is not None else n


# ----------------------------------------------------------------------------
# Wrapper
# ----------------------------------------------------------------------------
def positional_encoding_forward(x, pe_full, *, p=0.1, training=False, rng_key=None):
    """x: (B, S, D); pe_full: (max_len, D).  Returns dropout(x + pe[:S])."""
    B, S, D = x.shape
    assert pe_full.shape[0] >= S and pe_full.shape[1] == D
    pe = pe_full[:S, :].astype(x.dtype)

    # Flatten to a lane-dense 2-D problem: rows = batch, columns = S*D contiguous elems.
    C = S * D
    x2 = x.reshape(B, C)
    pe2 = pe.reshape(1, C)

    itemsize = jnp.dtype(x.dtype).itemsize
    # Batch tile: 8 rows if that divides B, otherwise the whole batch (full-dim block).
    TB = _pick_tile(B, 8, 8)
    # Column tile: largest multiple of 128 dividing C keeping the x block <= ~1 MiB,
    # otherwise the full C (a full-dim block is always legal).
    max_tc = max(128, (1 << 20) // max(1, TB * itemsize))
    TC = _pick_tile(C, 128, max_tc)

    # Columns outer, batch inner -> the PE block index is unchanged across the inner
    # axis, so its DMA is skipped for consecutive batch tiles.
    grid = (C // TC, B // TB)

    x_spec = pl.BlockSpec((TB, TC), lambda j, i: (i, j))
    pe_spec = pl.BlockSpec((1, TC), lambda j, i: (0, j))
    out_spec = pl.BlockSpec((TB, TC), lambda j, i: (i, j))

    compiler_params = pltpu.CompilerParams(
        dimension_semantics=("parallel", "parallel"),
        vmem_limit_bytes=32 * 1024 * 1024,
    )

    if (not training) or p == 0.0:
        out2 = pl.pallas_call(
            _pe_add_kernel,
            out_shape=jax.ShapeDtypeStruct((B, C), x.dtype),
            grid=grid,
            in_specs=[x_spec, pe_spec],
            out_specs=out_spec,
            compiler_params=compiler_params,
        )(x2, pe2)
        return out2.reshape(B, S, D)

    assert 0.0 <= p < 1.0, "dropout probability must be in [0, 1)"
    if rng_key is None:
        rng_key = jax.random.PRNGKey(0)
    # TODO(synk): dropout randoms are drawn wrapper-side (jax.random.uniform) instead of
    # the in-kernel TPU hardware PRNG so the kernel also lowers under CPU/interpret mode.
    u = jax.random.uniform(rng_key, (B, C), dtype=jnp.float32)

    kernel = functools.partial(
        _pe_add_dropout_kernel, p=float(p), scale=1.0 / (1.0 - float(p))
    )
    out2 = pl.pallas_call(
        kernel,
        out_shape=jax.ShapeDtypeStruct((B, C), x.dtype),
        grid=grid,
        in_specs=[x_spec, pe_spec, pl.BlockSpec((TB, TC), lambda j, i: (i, j))],
        out_specs=out_spec,
        compiler_params=compiler_params,
    )(x2, pe2, u)
    return out2.reshape(B, S, D)


# ----------------------------------------------------------------------------
# Demo / check
# ----------------------------------------------------------------------------
if __name__ == "__main__":
    B, S, D = 2, 8, 32
    MAX_LEN = 512
    P_DROP = 0.1

    root = jax.random.PRNGKey(0)
    k_x, k_drop = jax.random.split(root)
    x = jax.random.normal(k_x, (B, S, D), dtype=jnp.float32)

    pe_full = make_positional_encoding(D, max_len=MAX_LEN)

    # Eval mode: dropout == identity -> pure broadcast-add kernel, check vs reference.
    out_eval = positional_encoding_forward(x, pe_full, p=P_DROP, training=False)
    out_eval = jax.block_until_ready(out_eval)
    ref_eval = x + pe_full[None, :S, :]
    assert out_eval.shape == (B, S, D)
    assert jnp.allclose(out_eval, ref_eval, atol=1e-6, rtol=1e-6), "eval mismatch vs reference"

    # Training mode: mask comes from wrapper-side uniforms, so the reference mask is
    # reproducible with the same key -> exact deterministic check.
    out_train = positional_encoding_forward(
        x, pe_full, p=P_DROP, training=True, rng_key=k_drop)
    out_train = jax.block_until_ready(out_train)
    u = jax.random.uniform(k_drop, (B, S * D), dtype=jnp.float32).reshape(B, S, D)
    keep = u >= jnp.float32(P_DROP)
    ref_train = jnp.where(keep, ref_eval / (1.0 - P_DROP), 0.0).astype(x.dtype)
    assert out_train.shape == (B, S, D)
    assert jnp.allclose(out_train, ref_train, atol=1e-5, rtol=1e-5), "train mismatch vs reference"

    print("KERNEL_OK")
</pallas_src>

<mosaic_0001>
module attributes {stable_mosaic.version = 11 : i64} {
  func.func @_pe_add_kernel(%arg0: i32, %arg1: i32, %arg2: memref<2x256xf32, #tpu.memory_space<vmem>>, %arg3: memref<1x256xf32, #tpu.memory_space<vmem>>, %arg4: memref<2x256xf32, #tpu.memory_space<vmem>>) attributes {dimension_semantics = [#tpu.dimension_semantics<parallel>, #tpu.dimension_semantics<parallel>], iteration_bounds = array<i64: 1, 1>, scalar_prefetch = 0 : i64, scratch_operands = 0 : i64, tpu.core_type = #tpu.core_type<tc>, window_params = [{transform_indices = @transform_0, window_bounds = array<i64: 2, 256>}, {transform_indices = @transform_1, window_bounds = array<i64: 1, 256>}, {transform_indices = @transform_2, window_bounds = array<i64: 2, 256>}]} {
    %c0 = arith.constant 0 : index
    %c0_0 = arith.constant 0 : index
    %0 = vector.load %arg2[%c0, %c0_0] : memref<2x256xf32, #tpu.memory_space<vmem>>, vector<2x256xf32>
    %c0_1 = arith.constant 0 : index
    %c0_2 = arith.constant 0 : index
    %1 = vector.load %arg3[%c0_1, %c0_2] : memref<1x256xf32, #tpu.memory_space<vmem>>, vector<1x256xf32>
    %2 = vector.broadcast %1 : vector<1x256xf32> to vector<2x256xf32>
    %3 = arith.addf %0, %2 : vector<2x256xf32>
    %c0_3 = arith.constant 0 : index
    %c0_4 = arith.constant 0 : index
    %4 = vector.load %arg4[%c0_3, %c0_4] : memref<2x256xf32, #tpu.memory_space<vmem>>, vector<2x256xf32>
    tpu.vector_store %arg4[%c0_3, %c0_4], %3 {strides = array<i32>} : memref<2x256xf32, #tpu.memory_space<vmem>>, vector<2x256xf32>,
    return
  }
  func.func @transform_0(%arg0: i32, %arg1: i32) -> (i32, i32) {
    %c0_i32 = arith.constant 0 : i32
    return %arg1, %arg0 : i32, i32
  }
  func.func @transform_1(%arg0: i32, %arg1: i32) -> (i32, i32) {
    %c0_i32 = arith.constant 0 : i32
    %c0_i32_0 = arith.constant 0 : i32
    return %c0_i32, %arg0 : i32, i32
  }
  func.func @transform_2(%arg0: i32, %arg1: i32) -> (i32, i32) {
    %c0_i32 = arith.constant 0 : i32
    return %arg1, %arg0 : i32, i32
  }
}

</mosaic_0001>

<llo_original>
// kernel: tpu_custom_call.1
$region0: #{tpu_custom_call.1}
  #allocation0 [shape = 'u32[]', space=smem, size = 0x4, offset = 0x4, fixed_abs, tag = 'smem constant byte address 0x4 - core index']
  #allocation1 [shape = 'u32[144,128]{1,0:T(1,128)}', space=vmem, size = 0x12000, scoped, tag = 'internal scratch']
  %s0 = inlined_call_operand.hbm [shape: f32[2,256], index: 0, kind: input, shape index: {}]
  %s1 = inlined_call_operand.vmem [shape: f32[1,256], index: 1, kind: input, shape index: {}]
  %s2 = inlined_call_operand.hbm [shape: f32[2,256], index: 2, kind: output, shape index: {}]
  %s3 = sld [smem:[#allocation0]]
  $region22: #{tpu_custom_call.1} parent=0
    _
  %s5 = ssub.s32 1, %s3
  %s6 = scalar_select 0, %s5, %s3
  $region1: #{tpu_custom_call.1} parent=0
    #allocation2 [shape = 'u8[2048]{0}', space=vmem, size = 0x800, scoped, tag = 'input window, operand 0, single buffered']
    #allocation3 [shape = 's32[1]{0}', space=sflag, size = 0x4, scoped, tag = 'scoped memory for tpu_custom_call.1']
    #allocation4 [shape = 's32[1]{0}', space=sflag, size = 0x4, scoped, tag = 'scoped memory for tpu_custom_call.1']
    #allocation5 [shape = 'u8[2048]{0}', space=vmem, size = 0x800, scoped, tag = 'output window, operand 0, single buffered']
    %7 = vsyncpa [#allocation3], 0
    %8 = vsyncpa [#allocation4], 0
    // Predicated region
    $region2: #{tpu_custom_call.1} parent=1 // pred_check
      _
    $region3: #{tpu_custom_call.1} parent=1 // pred_check_branch
      %10 = sbr.rel (0) target = $region5
    $region4: #{tpu_custom_call.1} parent=1 // pred_region
      %s12 = ssub.s32 64, 64
      %13 = vsyncadd [#allocation3], %s12
      %s15 = sshll.u32 [#allocation2], 4
      %s16 = int_to_ptr.vmem [resolvable:$true] %s15
      %18 = dma.hbm_to_vmem [thread:$0]  %s0, 64, %s16, [#allocation3]
    $region5: #{tpu_custom_call.1} parent=1 // pred_fallthru
      _
    // Predicated region
    $region6: #{tpu_custom_call.1} parent=1 // pred_check
      _
    $region7: #{tpu_custom_call.1} parent=1 // pred_check_branch
      %20 = sbr.rel (0) target = $region9
    $region8: #{tpu_custom_call.1} parent=1 // pred_region
      _
    $region9: #{tpu_custom_call.1} parent=1 // pred_fallthru
      _
    // Predicated region
    $region10: #{tpu_custom_call.1} parent=1 // pred_check
      _
    $region11: #{tpu_custom_call.1} parent=1 // pred_check_branch
      %22 = sbr.rel (0) target = $region13
    $region12: #{tpu_custom_call.1} parent=1 // pred_region
      %23 = dma.done [#allocation3], 64
    $region13: #{tpu_custom_call.1} parent=1 // pred_fallthru
      _
    %v24 = vld [vmem:[#allocation2] sm:$0xf]
    %v25 = vld [vmem:[%s1] sm:$0x3]
    %v27 = vlaneseq
    %v28 = vshrl.u32 %v27, 7
    %v29 = vsub.s32 0, %v28
    %v30 = vrot.slane %v25, %v29
    %v31 = vlaneseq
    %v32 = vshrl.u32 %v31, 7
    %v33 = vsub.s32 1, %v32
    %v34 = vrot.slane %v25, %v33
    %v35 = vcombine.low %v30, %v34
    %v37 = vunpack.c.l.s4 1983009808
    %v38 = vunpack.c.0.s8 %v37
    %v39 = vlaneseq
    %v40 = vshrl.u32 %v39, 7
    %v41 = vsub.s32 %v38, %v40
    %v42 = vrot.slane %v35, %v41
    %v44 = vadd.f32 %v24, %v42
    %45 = vst [vmem:[#allocation5] sm:$0xf] %v44
    // Predicated region
    $region14: #{tpu_custom_call.1} parent=1 // pred_check
      _
    $region15: #{tpu_custom_call.1} parent=1 // pred_check_branch
      %47 = sbr.rel (0) target = $region17
    $region16: #{tpu_custom_call.1} parent=1 // pred_region
      %s49 = ssub.s32 64, 64
      %50 = vsyncadd [#allocation4], %s49
      %s52 = sshll.u32 [#allocation5], 4
      %s53 = int_to_ptr.vmem [resolvable:$true] %s52
      %55 = dma.vmem_to_hbm [thread:$0]  %s53, 64, %s2, [#allocation4]
    $region17: #{tpu_custom_call.1} parent=1 // pred_fallthru
      _
    // Predicated region
    $region18: #{tpu_custom_call.1} parent=1 // pred_check
      _
    $region19: #{tpu_custom_call.1} parent=1 // pred_check_branch
      %57 = sbr.rel (0) target = $region21
    $region20: #{tpu_custom_call.1} parent=1 // pred_region
      %58 = dma.done [#allocation4], 64
    $region21: #{tpu_custom_call.1} parent=1 // pred_fallthru
      _
    %59 = vsyncpa [#allocation3], 1
    %60 = vsyncpa [#allocation4], 1

</llo_original>
